<compile_context>
chip_gen: v7x
topology: tpu7x:2x2x1
jax: 0.10.0
libtpu: 0.0.40
codegen_flags: <defaults>
</compile_context>

<pallas_src>
import functools

import jax
import jax.numpy as jnp
from jax.experimental import pallas as pl
from jax.experimental.pallas import tpu as pltpu


def _device_kind() -> str:
    try:
        return jax.devices()[0].device_kind.lower()
    except Exception:
        return ""


def _tanh_dtype_for_device():
    # bf16 EUP exists on v6e / v7x; v5e (and older) transcendentals stay f32.
    kind = _device_kind()
    return jnp.bfloat16 if ("v6" in kind or "v7" in kind) else jnp.float32


def _vmem_capacity_bytes() -> int:
    try:
        return int(pltpu.get_tpu_info().vmem_capacity_bytes)
    except Exception:
        return 64 * 1024 * 1024          # conservative fallback (v7x per-TC)


def _encoder_kernel(x_ref, w_ref, b_ref, o_ref, *,
                    normalize: bool, inv_seq_len: float, tanh_dtype):
    """Grid = (batch tiles, seq tiles).  Project -> tanh -> accumulate the
    pooled sum directly in the resident f32 output block; scale by 1/S and
    optionally L2-normalize on the last sequence step."""
    sj = pl.program_id(1)

    @pl.when(sj == 0)
    def _():
        o_ref[...] = jnp.zeros_like(o_ref)

    tb, ts, h = x_ref.shape
    # ts is a multiple of 16 (or == S), so this reshape is layout-free.
    x = x_ref[...].reshape(tb * ts, h)            # (TB*TS, H)  bf16
    w = w_ref[...]                                # (H, H)      bf16
    b = b_ref[...]                                # (1, H)      f32

    # One large MXU matmul (M = TB*TS) with f32 accumulation + bias add.
    proj = jnp.dot(x, w, preferred_element_type=jnp.float32) + b
    # tanh on the EUP: bf16 on v6e/v7x (2x transcendental throughput), f32 on v5e.
    act = jnp.tanh(proj.astype(tanh_dtype)).astype(jnp.float32)

    # Per-sentence partial sum over this sequence tile, accumulated in f32.
    o_ref[...] += act.reshape(tb, ts, h).sum(axis=1)          # (TB, H)

    @pl.when(sj == pl.num_programs(1) - 1)
    def _():
        pooled = o_ref[...] * jnp.float32(inv_seq_len)        # mean = sum / S
        if normalize:
            sq = jnp.sum(pooled * pooled, axis=-1, keepdims=True)
            pooled = pooled * jax.lax.rsqrt(sq + jnp.float32(1e-12))
        o_ref[...] = pooled


def encode(token_embeds: jax.Array,
           w_proj: jax.Array,
           b_proj: jax.Array,
           *,
           normalize: bool = False,
           tb: int | None = None,
           ts: int | None = None,
           tanh_dtype=None) -> jax.Array:
    """Pallas-backed encode.

    token_embeds: (B, S, H)  -- output of the embedding lookup (glue)
    w_proj:       (H, H)     -- context-embedder projection weight
    b_proj:       (1, H)/(H,)-- projection bias
    returns:      (B, H) f32 -- pooled (optionally L2-normalized) embeddings
    """
    B, S, H = token_embeds.shape
    if b_proj.ndim == 1:
        b_proj = b_proj.reshape(1, H)

    kind = _device_kind()
    if tanh_dtype is None:
        tanh_dtype = jnp.bfloat16 if ("v6" in kind or "v7" in kind) else jnp.float32

    vmem_cap = _vmem_capacity_bytes()
    vmem_budget = int(0.75 * vmem_cap)            # ~48 MiB v7x, ~96 MiB v5e/v6e

    def est(tb_, ts_):
        # Everything live per grid step, incl. the f32 proj/tanh intermediates.
        return (2 * tb_ * ts_ * H * 2             # x double buffer (bf16)
                + 2 * H * H * 2                   # weight double buffer (bf16)
                + 2 * 8 * H * 4                   # bias (sublane-padded, f32)
                + 2 * tb_ * H * 4                 # output double buffer (f32)
                + 2 * tb_ * ts_ * H * 4)          # f32 proj + tanh/relayout temp

    # ---- sequence tile: a multiple of 16 (bf16 sublane tile) dividing S -----
    if ts is None or ts <= 0 or ts > S or S % ts != 0:
        ts = S
        if S >= 16:
            for cand in (512, 384, 256, 192, 128, 96, 64, 48, 32, 16):
                if cand <= S and S % cand == 0:
                    ts = cand
                    break
    while est(8, ts) > vmem_budget and ts % 32 == 0 and ts > 16:
        ts //= 2                                  # keep even the minimum tile in budget

    # ---- batch tile: target ~1024 MXU rows / step, fit VMEM, avoid padding --
    if tb is None:
        tb = 8 * pl.cdiv(max(8, 1024 // ts), 8)
        while tb > 8 and est(tb, ts) > vmem_budget:
            tb -= 8
        if tb >= B:
            tb = B
            if "v7" in kind and B >= 16 and B % 16 == 0:
                tb = B // 2                       # keep both v7x TensorCores busy
        else:
            for cand in range(tb, 7, -8):         # prefer a tile dividing B (no pad)
                if B % cand == 0:
                    tb = cand
                    break
    # Alignment guard (also covers a user-supplied tb): either tb == B
    # (full-extent block) or tb < B and sublane-aligned.
    if tb >= B:
        tb = B
    elif tb % 8 != 0:
        tb = 8 * pl.cdiv(tb, 8)
        if tb >= B:
            tb = B

    num_bt = pl.cdiv(B, tb)
    b_pad = num_bt * tb

    x = token_embeds
    if x.dtype != jnp.bfloat16:
        x = x.astype(jnp.bfloat16)   # TODO(synk): fuse this cast into the embedder upstream.
    if b_pad != B:
        # Padded sentences never mix with real ones (pooling is per-sentence);
        # their rows are sliced off below.
        x = jnp.pad(x, ((0, b_pad - B), (0, 0), (0, 0)))

    w_bf = w_proj.astype(jnp.bfloat16)
    b_f32 = b_proj.astype(jnp.float32)

    grid = (b_pad // tb, S // ts)

    e = est(tb, ts)
    vmem_limit = int(min(max(2 * e, 16 << 20), vmem_budget))
    vmem_limit = int(max(vmem_limit, min(e + (4 << 20), vmem_cap)))

    kernel = functools.partial(_encoder_kernel,
                               normalize=normalize,
                               inv_seq_len=1.0 / float(S),
                               tanh_dtype=tanh_dtype)

    out = pl.pallas_call(
        kernel,
        out_shape=jax.ShapeDtypeStruct((b_pad, H), jnp.float32),
        grid_spec=pltpu.PrefetchScalarGridSpec(
            num_scalar_prefetch=0,
            grid=grid,
            in_specs=[
                pl.BlockSpec((tb, ts, H), lambda i, j: (i, j, 0)),   # activations
                pl.BlockSpec((H, H), lambda i, j: (0, 0)),           # weight (resident)
                pl.BlockSpec((1, H), lambda i, j: (0, 0)),           # bias   (resident)
            ],
            out_specs=pl.BlockSpec((tb, H), lambda i, j: (i, 0)),    # lane-dense accumulator
        ),
        compiler_params=pltpu.CompilerParams(
            dimension_semantics=("parallel", "arbitrary"),
            vmem_limit_bytes=vmem_limit),
    )(x, w_bf, b_f32)

    return out[:B] if b_pad != B else out


def _reference_encode(token_embeds, w_proj, b_proj, normalize, tanh_dtype):
    # Same numerics as the kernel: bf16 inputs, f32 MXU accumulate,
    # activation in `tanh_dtype`, f32 pooling / normalization.
    x = token_embeds.astype(jnp.bfloat16)
    w = w_proj.astype(jnp.bfloat16)
    proj = jnp.einsum("bsh,hd->bsd", x, w, preferred_element_type=jnp.float32)
    proj = proj + b_proj.astype(jnp.float32).reshape(1, 1, -1)
    h = jnp.tanh(proj.astype(tanh_dtype)).astype(jnp.float32)
    pooled = jnp.mean(h, axis=1)
    if normalize:
        pooled = pooled * jax.lax.rsqrt(
            jnp.sum(pooled * pooled, axis=-1, keepdims=True) + 1e-12)
    return pooled


if __name__ == "__main__":
    # Small, deterministic synthetic setup (no checkpoints loaded).
    B, S, H, V = 2, 8, 128, 32          # batch, seq, hidden, vocab
    key = jax.random.PRNGKey(0)
    k_emb, k_w, k_b, k_ids = jax.random.split(key, 4)

    # "Parameters" of the synthetic context embedder; embedding table kept in
    # bf16 so the kernel input needs no wrapper-side cast or extra HBM pass.
    embed_table = (jax.random.normal(k_emb, (V, H), dtype=jnp.float32) * 0.02
                   ).astype(jnp.bfloat16)
    w_proj = jax.random.normal(k_w, (H, H), dtype=jnp.float32) * 0.02
    b_proj = jax.random.normal(k_b, (1, H), dtype=jnp.float32) * 0.02

    # Input token ids -> embedding lookup (glue, plain JAX).
    input_ids = jax.random.randint(k_ids, (B, S), 0, V)
    token_embeds = embed_table[input_ids]                         # (B, S, H) bf16

    act_dt = _tanh_dtype_for_device()
    ok = True
    for norm in (True, False):
        sent_emb = encode(token_embeds, w_proj, b_proj,
                          normalize=norm, tanh_dtype=act_dt)
        sent_emb = jax.block_until_ready(sent_emb)
        ref = _reference_encode(token_embeds, w_proj, b_proj, norm, act_dt)
        ok &= (sent_emb.shape == (B, H))
        ok &= bool(jnp.allclose(sent_emb, ref, atol=2e-4, rtol=2e-4))

    assert ok
    print("KERNEL_OK")
</pallas_src>

<mosaic_0001>
module attributes {stable_mosaic.version = 11 : i64} {
  func.func @_encoder_kernel(%arg0: i32, %arg1: i32, %arg2: memref<2x8x128xbf16, #tpu.memory_space<vmem>>, %arg3: memref<128x128xbf16, #tpu.memory_space<vmem>>, %arg4: memref<1x128xf32, #tpu.memory_space<vmem>>, %arg5: memref<2x128xf32, #tpu.memory_space<vmem>>) attributes {dimension_semantics = [#tpu.dimension_semantics<parallel>, #tpu.dimension_semantics<arbitrary>], iteration_bounds = array<i64: 1, 1>, scalar_prefetch = 0 : i64, scratch_operands = 0 : i64, tpu.core_type = #tpu.core_type<tc>, window_params = [{transform_indices = @transform_0, window_bounds = array<i64: 2, 8, 128>}, {pipeline_mode = #tpu.pipeline_mode<synchronous>, transform_indices = @transform_1, window_bounds = array<i64: 128, 128>}, {pipeline_mode = #tpu.pipeline_mode<synchronous>, transform_indices = @transform_2, window_bounds = array<i64: 1, 128>}, {transform_indices = @transform_3, window_bounds = array<i64: 2, 128>}]} {
    %c0_i32 = arith.constant 0 : i32
    %0 = arith.cmpi eq, %arg1, %c0_i32 : i32
    %1 = arith.extui %0 : i1 to i32
    %c0_i32_0 = arith.constant 0 : i32
    %2 = arith.cmpi ne, %1, %c0_i32_0 : i32
    scf.if %2 {
      %cst_14 = arith.constant 0.000000e+00 : f32
      %19 = vector.broadcast %cst_14 : f32 to vector<2x128xf32>
      %c0_15 = arith.constant 0 : index
      %c0_16 = arith.constant 0 : index
      %20 = vector.load %arg5[%c0_15, %c0_16] : memref<2x128xf32, #tpu.memory_space<vmem>>, vector<2x128xf32>
      tpu.vector_store %arg5[%c0_15, %c0_16], %19 {strides = array<i32>} : memref<2x128xf32, #tpu.memory_space<vmem>>, vector<2x128xf32>,
    } else {
    }
    %c0 = arith.constant 0 : index
    %c0_1 = arith.constant 0 : index
    %c0_2 = arith.constant 0 : index
    %3 = vector.load %arg2[%c0, %c0_1, %c0_2] : memref<2x8x128xbf16, #tpu.memory_space<vmem>>, vector<2x8x128xbf16>
    %4 = vector.shape_cast %3 : vector<2x8x128xbf16> to vector<16x128xbf16>
    %c0_3 = arith.constant 0 : index
    %c0_4 = arith.constant 0 : index
    %5 = vector.load %arg3[%c0_3, %c0_4] : memref<128x128xbf16, #tpu.memory_space<vmem>>, vector<128x128xbf16>
    %c0_5 = arith.constant 0 : index
    %c0_6 = arith.constant 0 : index
    %6 = vector.load %arg4[%c0_5, %c0_6] : memref<1x128xf32, #tpu.memory_space<vmem>>, vector<1x128xf32>
    %cst = arith.constant dense<0.000000e+00> : vector<16x128xf32>
    %7 = tpu.matmul %4, %5, %cst {dimension_numbers = #tpu.dot_dimension_numbers<[1], [0], [0], [1], [0, 0, 1, 1], [], []>} : vector<16x128xbf16>, vector<128x128xbf16>, vector<16x128xf32> -> vector<16x128xf32>
    %8 = vector.broadcast %6 : vector<1x128xf32> to vector<16x128xf32>
    %9 = arith.addf %7, %8 : vector<16x128xf32>
    %10 = math.tanh %9 : vector<16x128xf32>
    %c0_7 = arith.constant 0 : index
    %c0_8 = arith.constant 0 : index
    %11 = vector.load %arg5[%c0_7, %c0_8] : memref<2x128xf32, #tpu.memory_space<vmem>>, vector<2x128xf32>
    %12 = vector.shape_cast %10 : vector<16x128xf32> to vector<2x8x128xf32>
    %cst_9 = arith.constant dense<0.000000e+00> : vector<2x128xf32>
    %13 = vector.multi_reduction <add>, %12, %cst_9 [1] : vector<2x8x128xf32> to vector<2x128xf32>
    %14 = arith.addf %11, %13 : vector<2x128xf32>
    %c0_10 = arith.constant 0 : index
    %c0_11 = arith.constant 0 : index
    %15 = vector.load %arg5[%c0_10, %c0_11] : memref<2x128xf32, #tpu.memory_space<vmem>>, vector<2x128xf32>
    tpu.vector_store %arg5[%c0_10, %c0_11], %14 {strides = array<i32>} : memref<2x128xf32, #tpu.memory_space<vmem>>, vector<2x128xf32>,
    %c0_i32_12 = arith.constant 0 : i32
    %16 = arith.cmpi eq, %arg1, %c0_i32_12 : i32
    %17 = arith.extui %16 : i1 to i32
    %c0_i32_13 = arith.constant 0 : i32
    %18 = arith.cmpi ne, %17, %c0_i32_13 : i32
    scf.if %18 {
      %c0_14 = arith.constant 0 : index
      %c0_15 = arith.constant 0 : index
      %19 = vector.load %arg5[%c0_14, %c0_15] : memref<2x128xf32, #tpu.memory_space<vmem>>, vector<2x128xf32>
      %cst_16 = arith.constant 1.250000e-01 : f32
      %20 = vector.broadcast %cst_16 : f32 to vector<2x128xf32>
      %21 = arith.mulf %19, %20 : vector<2x128xf32>
      %22 = arith.mulf %21, %21 : vector<2x128xf32>
      %cst_17 = arith.constant dense<0.000000e+00> : vector<2xf32>
      %23 = vector.multi_reduction <add>, %22, %cst_17 [1] : vector<2x128xf32> to vector<2xf32>
      %24 = vector.shape_cast %23 : vector<2xf32> to vector<2x1xf32>
      %cst_18 = arith.constant 9.99999996E-13 : f32
      %25 = vector.broadcast %cst_18 : f32 to vector<2x1xf32>
      %26 = arith.addf %24, %25 : vector<2x1xf32>
      %27 = math.rsqrt %26 : vector<2x1xf32>
      %28 = vector.broadcast %27 : vector<2x1xf32> to vector<2x128xf32>
      %29 = arith.mulf %21, %28 : vector<2x128xf32>
      %c0_19 = arith.constant 0 : index
      %c0_20 = arith.constant 0 : index
      %30 = vector.load %arg5[%c0_19, %c0_20] : memref<2x128xf32, #tpu.memory_space<vmem>>, vector<2x128xf32>
      tpu.vector_store %arg5[%c0_19, %c0_20], %29 {strides = array<i32>} : memref<2x128xf32, #tpu.memory_space<vmem>>, vector<2x128xf32>,
    } else {
    }
    return
  }
  func.func @transform_0(%arg0: i32, %arg1: i32) -> (i32, i32, i32) {
    %c0_i32 = arith.constant 0 : i32
    %c0_i32_0 = arith.constant 0 : i32
    return %arg0, %arg1, %c0_i32 : i32, i32, i32
  }
  func.func @transform_1(%arg0: i32, %arg1: i32) -> (i32, i32) {
    %c0_i32 = arith.constant 0 : i32
    %c0_i32_0 = arith.constant 0 : i32
    %c0_i32_1 = arith.constant 0 : i32
    return %c0_i32, %c0_i32_0 : i32, i32
  }
  func.func @transform_2(%arg0: i32, %arg1: i32) -> (i32, i32) {
    %c0_i32 = arith.constant 0 : i32
    %c0_i32_0 = arith.constant 0 : i32
    %c0_i32_1 = arith.constant 0 : i32
    return %c0_i32, %c0_i32_0 : i32, i32
  }
  func.func @transform_3(%arg0: i32, %arg1: i32) -> (i32, i32) {
    %c0_i32 = arith.constant 0 : i32
    %c0_i32_0 = arith.constant 0 : i32
    return %arg0, %c0_i32 : i32, i32
  }
}

</mosaic_0001>

<llo_original>
// kernel: tpu_custom_call.1
$region0: #{tpu_custom_call.1}
  #allocation0 [shape = 'u32[]', space=smem, size = 0x4, offset = 0x4, fixed_abs, tag = 'smem constant byte address 0x4 - core index']
  #allocation1 [shape = 'u32[144,128]{1,0:T(1,128)}', space=vmem, size = 0x12000, scoped, tag = 'internal scratch']
  %s0 = inlined_call_operand.hbm [shape: bf16[2,8,128], index: 0, kind: input, shape index: {}]
  %s1 = inlined_call_operand.hbm [shape: bf16[128,128], index: 1, kind: input, shape index: {}]
  %s2 = inlined_call_operand.vmem [shape: f32[1,128], index: 2, kind: input, shape index: {}]
  %s3 = inlined_call_operand.hbm [shape: f32[2,128], index: 3, kind: output, shape index: {}]
  %s4 = sld [smem:[#allocation0]]
  $region38: #{tpu_custom_call.1} parent=0
    _
  %s6 = ssub.s32 1, %s4
  %s7 = scalar_select 0, %s6, %s4
  $region1: #{tpu_custom_call.1} parent=0
    #allocation2 [shape = 'u8[4096]{0}', space=vmem, size = 0x1000, scoped, tag = 'input window, operand 0, single buffered']
    #allocation3 [shape = 's32[1]{0}', space=sflag, size = 0x4, scoped, tag = 'scoped memory for tpu_custom_call.1']
    #allocation4 [shape = 's32[1]{0}', space=sflag, size = 0x4, scoped, tag = 'scoped memory for tpu_custom_call.1']
    #allocation5 [shape = 'u8[32768]{0}', space=vmem, size = 0x8000, scoped, tag = 'input window, operand 1, single buffered']
    #allocation6 [shape = 's32[1]{0}', space=sflag, size = 0x4, scoped, tag = 'scoped memory for tpu_custom_call.1']
    #allocation7 [shape = 'u8[1024]{0}', space=vmem, size = 0x400, scoped, tag = 'output window, operand 0, single buffered']
    %8 = vsyncpa [#allocation3], 0
    %9 = vsyncpa [#allocation6], 0
    %10 = vsyncpa [#allocation4], 0
    // Predicated region
    $region2: #{tpu_custom_call.1} parent=1 // pred_check
      _
    $region3: #{tpu_custom_call.1} parent=1 // pred_check_branch
      %12 = sbr.rel (0) target = $region5
    $region4: #{tpu_custom_call.1} parent=1 // pred_region
      %s14 = ssub.s32 128, 128
      %15 = vsyncadd [#allocation3], %s14
      %s16 = sshll.u32 [#allocation2], 4
      %s17 = int_to_ptr.vmem [resolvable:$true] %s16
      %22 = dma.hbm_to_vmem [thread:$0]  %s0, 128, %s17, [#allocation3], 64, 64, 4
    $region5: #{tpu_custom_call.1} parent=1 // pred_fallthru
      _
    // Predicated region
    $region6: #{tpu_custom_call.1} parent=1 // pred_check
      _
    $region7: #{tpu_custom_call.1} parent=1 // pred_check_branch
      %24 = sbr.rel (0) target = $region9
    $region8: #{tpu_custom_call.1} parent=1 // pred_region
      %s26 = ssub.s32 1024, 1024
      %27 = vsyncadd [#allocation6], %s26
      %s28 = sshll.u32 [#allocation5], 4
      %s29 = int_to_ptr.vmem [resolvable:$true] %s28
      %34 = dma.hbm_to_vmem [thread:$0]  %s1, 1024, %s29, [#allocation6], 64, 64, 4
    $region9: #{tpu_custom_call.1} parent=1 // pred_fallthru
      _
    // Predicated region
    $region10: #{tpu_custom_call.1} parent=1 // pred_check
      _
    $region11: #{tpu_custom_call.1} parent=1 // pred_check_branch
      %36 = sbr.rel (0) target = $region13
    $region12: #{tpu_custom_call.1} parent=1 // pred_region
      _
    $region13: #{tpu_custom_call.1} parent=1 // pred_fallthru
      _
    // Predicated region
    $region14: #{tpu_custom_call.1} parent=1 // pred_check
      _
    $region15: #{tpu_custom_call.1} parent=1 // pred_check_branch
      %38 = sbr.rel (0) target = $region17
    $region16: #{tpu_custom_call.1} parent=1 // pred_region
      %39 = dma.done [#allocation3], 128
    $region17: #{tpu_custom_call.1} parent=1 // pred_fallthru
      _
    // Predicated region
    $region18: #{tpu_custom_call.1} parent=1 // pred_check
      _
    $region19: #{tpu_custom_call.1} parent=1 // pred_check_branch
      %41 = sbr.rel (0) target = $region21
    $region20: #{tpu_custom_call.1} parent=1 // pred_region
      %42 = dma.done [#allocation6], 1024
    $region21: #{tpu_custom_call.1} parent=1 // pred_fallthru
      _
    %p44 = scmp.eq.s32.totalorder 0, 0
    // Predicated region
    $region22: #{tpu_custom_call.1} parent=1 // pred_check
      %p45 = pneg %p44
    $region23: #{tpu_custom_call.1} parent=1 // pred_check_branch
      %47 = sbr.rel (%p45) target = $region25
    $region24: #{tpu_custom_call.1} parent=1 // pred_region
      %48 = vst [vmem:[#allocation7] sm:$0x3] 0.0
    $region25: #{tpu_custom_call.1} parent=1 // pred_fallthru
      _
    %v49 = vld [vmem:[#allocation2] sm:$0xf]
    %v50 = vld [vmem:[#allocation2 + $0x4] sm:$0xf]
    %v51 = vld [vmem:[#allocation5] sm:$0xf]
    %v52 = vld [vmem:[#allocation5 + $0x4] sm:$0xf]
    %v53 = vld [vmem:[#allocation5 + $0x8] sm:$0xf]
    %v54 = vld [vmem:[#allocation5 + $0xc] sm:$0xf]
    %v55 = vld [vmem:[#allocation5 + $0x10] sm:$0xf]
    %v56 = vld [vmem:[#allocation5 + $0x14] sm:$0xf]
    %v57 = vld [vmem:[#allocation5 + $0x18] sm:$0xf]
    %v58 = vld [vmem:[#allocation5 + $0x1c] sm:$0xf]
    %v59 = vld [vmem:[#allocation5 + $0x20] sm:$0xf]
    %v60 = vld [vmem:[#allocation5 + $0x24] sm:$0xf]
    %v61 = vld [vmem:[#allocation5 + $0x28] sm:$0xf]
    %v62 = vld [vmem:[#allocation5 + $0x2c] sm:$0xf]
    %v63 = vld [vmem:[#allocation5 + $0x30] sm:$0xf]
    %v64 = vld [vmem:[#allocation5 + $0x34] sm:$0xf]
    %v65 = vld [vmem:[#allocation5 + $0x38] sm:$0xf]
    %v66 = vld [vmem:[#allocation5 + $0x3c] sm:$0xf]
    %v67 = vld [vmem:[%s2] sm:$0x1]
    %v69 = vlaneseq
    %v70 = vshrl.u32 %v69, 7
    %v71 = vsub.s32 0, %v70
    %v72 = vrot.slane %v67, %v71
    %v76 = vunpack.c.l.b16 %v49
    %v77 = vunpack.c.l.b16 %v50
    %v78 = vpack.c.b16 %v77, %v76
    %v96 = vunpack.c.l.b16 %v51
    %v97 = vunpack.c.l.b16 %v52
    %v98 = vunpack.c.l.b16 %v53
    %v99 = vunpack.c.l.b16 %v54
    %v100 = vunpack.c.l.b16 %v55
    %v101 = vunpack.c.l.b16 %v56
    %v102 = vunpack.c.l.b16 %v57
    %v103 = vunpack.c.l.b16 %v58
    %v104 = vunpack.c.l.b16 %v59
    %v105 = vunpack.c.l.b16 %v60
    %v106 = vunpack.c.l.b16 %v61
    %v107 = vunpack.c.l.b16 %v62
    %v108 = vunpack.c.l.b16 %v63
    %v109 = vunpack.c.l.b16 %v64
    %v110 = vunpack.c.l.b16 %v65
    %v111 = vunpack.c.l.b16 %v66
    %v112 = vpack.c.b16 %v97, %v96
    %v113 = vpack.c.b16 %v99, %v98
    %v114 = vpack.c.b16 %v101, %v100
    %v115 = vpack.c.b16 %v103, %v102
    %v116 = vpack.c.b16 %v105, %v104
    %v117 = vpack.c.b16 %v107, %v106
    %v118 = vpack.c.b16 %v109, %v108
    %v119 = vpack.c.b16 %v111, %v110
    %128 = vmatprep.subr.bf16.mxu0 0
    %129 = vmatpush1.bf16.msra.mxu0 %v112
    %130 = vmatprep.subr.bf16.mxu0 0
    %131 = vmatpush1.bf16.msra.mxu0 %v113
    %132 = vmatprep.subr.bf16.mxu0 0
    %133 = vmatpush1.bf16.msra.mxu0 %v114
    %134 = vmatprep.subr.bf16.mxu0 0
    %135 = vmatpush1.bf16.msra.mxu0 %v115
    %136 = vmatprep.subr.bf16.mxu0 0
    %137 = vmatpush1.bf16.msra.mxu0 %v116
    %138 = vmatprep.subr.bf16.mxu0 0
    %139 = vmatpush1.bf16.msra.mxu0 %v117
    %140 = vmatprep.subr.bf16.mxu0 0
    %141 = vmatpush1.bf16.msra.mxu0 %v118
    %142 = vmatprep.subr.bf16.mxu0 0
    %143 = vmatpush1.bf16.msra.mxu0 %v119
    %144 = vmatprep.subr.bf16.mxu0 0
    %145 = vmatpush1.bf16.msra.mxu0 0
    %146 = vmatprep.subr.bf16.mxu0 0
    %147 = vmatpush1.bf16.msra.mxu0 0
    %148 = vmatprep.subr.bf16.mxu0 0
    %149 = vmatpush1.bf16.msra.mxu0 0
    %150 = vmatprep.subr.bf16.mxu0 0
    %151 = vmatpush1.bf16.msra.mxu0 0
    %152 = vmatprep.subr.bf16.mxu0 0
    %153 = vmatpush1.bf16.msra.mxu0 0
    %154 = vmatprep.subr.bf16.mxu0 0
    %155 = vmatpush1.bf16.msra.mxu0 0
    %156 = vmatprep.subr.bf16.mxu0 0
    %157 = vmatpush1.bf16.msra.mxu0 0
    %158 = vmatprep.subr.bf16.mxu0 0
    %159 = vmatpush1.bf16.msra.mxu0 0
    %160 = vmatprep.mubr.bf16.mxu0 0
    %161 = vmatmul.mubr.bf16.gmra.mrb[0].mxu0 %v78
    %v162 = vpop.f32.mrb[0].mxu0
    %v163 = vadd.f32 %v72, %v162
    %v164 = vpop.f32.mrb[0].mxu0
    %v165 = vpop.f32.mrb[0].mxu0
    %v166 = vadd.f32 %v72, %v165
    %v167 = vpop.f32.mrb[0].mxu0
    %168 = vdwg.mxu0
    %v169 = vtanh.pop %v163
    %v170 = vtanh.pop %v166
    %v171 = vld [vmem:[#allocation7] sm:$0x3]
    %v172 = vrot.slane %v169, 4
    %v173 = vadd.f32 %v169, %v172
    %v174 = vrot.slane %v173, 2
    %v175 = vadd.f32 %v173, %v174
    %v176 = vrot.slane %v175, 1
    %v177 = vadd.f32 %v175, %v176
    %v178 = vrot.slane %v170, 4
    %v179 = vadd.f32 %v170, %v178
    %v180 = vrot.slane %v179, 2
    %v181 = vadd.f32 %v179, %v180
    %v182 = vrot.slane %v181, 1
    %v183 = vadd.f32 %v181, %v182
    %vm186 = vcmask 1041409
    %v187 = vsel %vm186, %v183, %v177
    %v189 = vadd.f32 %v171, %v187
    %190 = vst [vmem:[#allocation7] sm:$0x3] %v189
    // Predicated region
    $region26: #{tpu_custom_call.1} parent=1 // pred_check
      %p191 = pneg %p44
    $region27: #{tpu_custom_call.1} parent=1 // pred_check_branch
      %193 = sbr.rel (%p191) target = $region29
    $region28: #{tpu_custom_call.1} parent=1 // pred_region
      %v194 = vld [vmem:[#allocation7] sm:$0x3]
      %v195 = vmul.f32 %v194, 0.125
      %v196 = vmul.f32 %v195, %v195
      %vm197 = vcmask 1041408
      %v198 = vsel %vm197, %v196, 0.0
      %199 = vadd.xlane.f32.xlu0 %v198
      %v200 = vpop.xlane.xlu0 %199
      %v201 = vadd.f32 %v200, 1e-12
      %v202 = vrsqrt.pop %v201
      %v203 = vmul.f32 %v195, %v202
      %204 = vst [vmem:[#allocation7] sm:$0x3] %v203
    $region29: #{tpu_custom_call.1} parent=1 // pred_fallthru
      _
    // Predicated region
    $region30: #{tpu_custom_call.1} parent=1 // pred_check
      _
    $region31: #{tpu_custom_call.1} parent=1 // pred_check_branch
      %206 = sbr.rel (0) target = $region33
    $region32: #{tpu_custom_call.1} parent=1 // pred_region
      %s208 = ssub.s32 32, 32
      %209 = vsyncadd [#allocation4], %s208
      %s211 = sshll.u32 [#allocation7], 4
      %s212 = int_to_ptr.vmem [resolvable:$true] %s211
      %214 = dma.vmem_to_hbm [thread:$0]  %s212, 32, %s3, [#allocation4]
    $region33: #{tpu_custom_call.1} parent=1 // pred_fallthru
      _
    // Predicated region
    $region34: #{tpu_custom_call.1} parent=1 // pred_check
      _
    $region35: #{tpu_custom_call.1} parent=1 // pred_check_branch
      %216 = sbr.rel (0) target = $region37
    $region36: #{tpu_custom_call.1} parent=1 // pred_region
      %217 = dma.done [#allocation4], 32
    $region37: #{tpu_custom_call.1} parent=1 // pred_fallthru
      _
    %218 = vsyncpa [#allocation3], 1
    %219 = vsyncpa [#allocation6], 1
    %220 = vsyncpa [#allocation4], 1

</llo_original>
